<compile_context>
chip_gen: v6e
topology: v6e:2x2x1
jax: 0.10.0
libtpu: 0.0.40
codegen_flags: <defaults>
</compile_context>

<pallas_src>
import functools

import jax
import jax.numpy as jnp
import numpy as np
from jax.experimental import pallas as pl
from jax.experimental.pallas import tpu as pltpu


# ----------------------------------------------------------------------------
# Generation-aware knobs.
# ----------------------------------------------------------------------------
def _knobs():
    try:
        kind = jax.devices()[0].device_kind.lower()
    except Exception:
        kind = ""
    if ("v5" in kind) or ("v6" in kind):
        # 128 MiB physical VMEM: raise the scoped limit and allow big row tiles.
        return {"vmem_limit": 64 * 1024 * 1024, "row_tile_cap": 512}
    # v7x (64 MiB physical VMEM) and unknown devices: stay conservative.
    return {"vmem_limit": 48 * 1024 * 1024, "row_tile_cap": 256}


def _pick_row_tile(n, cap, requested=None, step=8):
    if requested is not None:
        assert n % requested == 0, "row_tile must divide N"
        assert requested == n or requested % step == 0
        return requested
    if n % step != 0:
        return n
    best, t = step, step
    while t <= min(n, cap):
        if n % t == 0:
            best = t
        t += step
    return best


# ----------------------------------------------------------------------------
# Kernel A: fused linear transform + attention-coefficient projection (MXU).
# ----------------------------------------------------------------------------
def gat_transform_kernel(x_ref, w_ref, out_ref):
    out_ref[...] = jnp.dot(x_ref[...].astype(jnp.float32), w_ref[...],
                           preferred_element_type=jnp.float32)


def gat_transform(x, w_prime, row_tile=None):
    n, c_in = x.shape
    fw = w_prime.shape[1]
    knobs = _knobs()
    tile = _pick_row_tile(n, cap=knobs["row_tile_cap"], requested=row_tile, step=8)
    return pl.pallas_call(
        gat_transform_kernel,
        out_shape=jax.ShapeDtypeStruct((n, fw), jnp.float32),
        grid=(n // tile,),
        in_specs=[pl.BlockSpec((tile, c_in), lambda i: (i, 0)),   # x row tile
                  pl.BlockSpec((c_in, fw), lambda i: (0, 0))],    # W' resident
        out_specs=pl.BlockSpec((tile, fw), lambda i: (i, 0)),
        compiler_params=pltpu.CompilerParams(
            dimension_semantics=("parallel",),
            vmem_limit_bytes=knobs["vmem_limit"]),
    )(x, w_prime)


# ----------------------------------------------------------------------------
# Kernel B: masked attention softmax + aggregation, tiled over destination rows.
# ----------------------------------------------------------------------------
def gat_attention_kernel(a_dst_ref, adj_ref, a_srcT_ref, h_ref, bias_ref,
                         out_ref, acc_ref, *, heads, out_ch, apply_elu):
    # Decode the int8 adjacency into the additive mask ONCE per tile
    # (hoisted out of the head loop): nonzero -> 0, zero -> -1e9.
    adj_bias = jnp.where(adj_ref[...] != 0, 0.0, -1e9).astype(jnp.float32)  # [TILE, N]
    a_dst = a_dst_ref[...]                   # [TILE, heads]
    a_srcT = a_srcT_ref[...]                 # [heads, N]
    h = h_ref[...]                           # [N, F]

    for hd in range(heads):                  # static unroll over heads (4 or 1)
        lo = hd * out_ch
        e = a_dst[:, hd:hd + 1] + a_srcT[hd:hd + 1, :]               # [TILE, N]
        e = jnp.where(e > 0, e, 0.2 * e)                             # LeakyReLU(0.2)
        e = e + adj_bias                                             # additive edge mask
        m = jnp.max(e, axis=-1, keepdims=True)
        p = jnp.exp(e - m)                                           # un-normalized probs
        s = jnp.sum(p, axis=-1, keepdims=True)
        o = jnp.dot(p, h[:, lo:lo + out_ch],
                    preferred_element_type=jnp.float32)              # [TILE, out_ch]
        # Normalize AFTER the matmul: exact divide on [TILE, out_ch], not a
        # [TILE, N] multiply.  Per-head result lands in the VMEM scratch so the
        # big [TILE, N] temporaries can die between heads (no concat either).
        acc_ref[:, lo:lo + out_ch] = o / s

    out = acc_ref[...] + bias_ref[...]
    if apply_elu:
        out = jnp.where(out > 0, out, jnp.expm1(out))                # ELU
    out_ref[...] = out.astype(out_ref.dtype)                        # single lane-dense store


def gat_attention(a_dst, adj_i8, a_srcT, h, bias, *, heads, out_ch, apply_elu,
                  row_tile=None):
    n = h.shape[0]
    f = heads * out_ch
    knobs = _knobs()
    # step=32 keeps the int8 adjacency block on its native (32, 128) tiling.
    tile = _pick_row_tile(n, cap=knobs["row_tile_cap"], requested=row_tile, step=32)
    kernel = functools.partial(gat_attention_kernel, heads=heads, out_ch=out_ch,
                               apply_elu=apply_elu)
    return pl.pallas_call(
        kernel,
        out_shape=jax.ShapeDtypeStruct((n, f), jnp.float32),
        grid=(n // tile,),
        in_specs=[
            pl.BlockSpec((tile, heads), lambda i: (i, 0)),   # a_dst row tile
            pl.BlockSpec((tile, n), lambda i: (i, 0)),       # int8 adjacency tile (only per-step stream)
            pl.BlockSpec((heads, n), lambda i: (0, 0)),      # a_src^T (resident, DMA'd once)
            pl.BlockSpec((n, f), lambda i: (0, 0)),          # h (resident, DMA'd once)
            pl.BlockSpec((1, f), lambda i: (0, 0)),          # bias (resident)
        ],
        out_specs=pl.BlockSpec((tile, f), lambda i: (i, 0)),
        scratch_shapes=[pltpu.VMEM((tile, f), jnp.float32)], # per-head output accumulator
        compiler_params=pltpu.CompilerParams(
            dimension_semantics=("parallel",),               # row tiles independent (v7x megacore)
            vmem_limit_bytes=knobs["vmem_limit"]),
    )(a_dst, adj_i8, a_srcT, h, bias)


# ----------------------------------------------------------------------------
# Layer / model wrappers.
# ----------------------------------------------------------------------------
def _build_att_matrix(att_src, att_dst):
    """Block-diagonal [heads*out_ch, 2*heads]: columns 0..heads-1 -> a_src, rest -> a_dst."""
    heads, out_ch = att_src.shape
    f = heads * out_ch
    a = jnp.zeros((f, 2 * heads), dtype=jnp.float32)
    for hd in range(heads):
        a = a.at[hd * out_ch:(hd + 1) * out_ch, hd].set(att_src[hd])
        a = a.at[hd * out_ch:(hd + 1) * out_ch, heads + hd].set(att_dst[hd])
    return a


def gat_conv_pallas(x, adj_i8, w, att_src, att_dst, bias, *, heads, out_ch,
                    apply_elu, row_tile=None):
    f = heads * out_ch
    att_mat = _build_att_matrix(att_src, att_dst)               # [F, 2*heads]
    w_prime = jnp.concatenate([w, w @ att_mat], axis=1)         # fold alpha proj into W
    h_alpha = gat_transform(x, w_prime, row_tile=row_tile)      # Pallas kernel A
    h = h_alpha[:, :f]                                          # [N, F]
    a_srcT = h_alpha[:, f:f + heads].T                          # [heads, N] tiny plumbing
    a_dst = h_alpha[:, f + heads:]                              # [N, heads]
    return gat_attention(a_dst, adj_i8, a_srcT, h, bias, heads=heads,
                         out_ch=out_ch, apply_elu=apply_elu, row_tile=row_tile)


def gat_embed_forward(x, adj, params, row_tile=None):
    n = x.shape[0]
    # Pad the node axis to a multiple of 128 so every [TILE, N] op is lane-dense.
    n_pad = ((n + 127) // 128) * 128
    pad = n_pad - n
    if pad:
        x = jnp.pad(x, ((0, pad), (0, 0)))
        adj = jnp.pad(adj, ((0, pad), (0, pad)))
    # int8 adjacency (decoded to the 0/-1e9 bias in-kernel): 4x less DMA + VMEM
    # than streaming a float32 additive mask; shared by both layers.
    adj_i8 = (adj > 0).astype(jnp.int8)
    h = gat_conv_pallas(x, adj_i8, params["w1"], params["att_src1"],
                        params["att_dst1"], params["bias1"], heads=4,
                        out_ch=params["hidden"], apply_elu=True, row_tile=row_tile)
    y = gat_conv_pallas(h, adj_i8, params["w2"], params["att_src2"],
                        params["att_dst2"], params["bias2"], heads=1,
                        out_ch=params["out_ch"], apply_elu=False, row_tile=row_tile)
    return y[:n]


# ----------------------------------------------------------------------------
# Pure-JAX reference (same GATConv math, dense adjacency).
# ----------------------------------------------------------------------------
def gat_conv_ref(x, adj, w, att_src, att_dst, bias, *, heads, out_ch, apply_elu):
    h = x @ w
    outs = []
    for hd in range(heads):
        lo, hi = hd * out_ch, (hd + 1) * out_ch
        hh = h[:, lo:hi]
        a_src = (hh * att_src[hd]).sum(-1)
        a_dst = (hh * att_dst[hd]).sum(-1)
        e = a_dst[:, None] + a_src[None, :]
        e = jnp.where(e > 0, e, 0.2 * e)
        e = jnp.where(adj > 0, e, -1e9)
        attn = jax.nn.softmax(e, axis=-1)
        o = attn @ hh + bias[0, lo:hi]
        if apply_elu:
            o = jnp.where(o > 0, o, jnp.expm1(o))
        outs.append(o)
    return jnp.concatenate(outs, axis=-1)


def gat_embed_ref(x, adj, params):
    h = gat_conv_ref(x, adj, params["w1"], params["att_src1"], params["att_dst1"],
                     params["bias1"], heads=4, out_ch=params["hidden"],
                     apply_elu=True)
    return gat_conv_ref(h, adj, params["w2"], params["att_src2"], params["att_dst2"],
                        params["bias2"], heads=1, out_ch=params["out_ch"],
                        apply_elu=False)


if __name__ == "__main__":
    N = 64              # number of graph nodes (padded to 128 internally)
    in_channels = 16
    hidden_channels = 8
    out_channels = 8
    heads1 = 4

    key = jax.random.PRNGKey(0)
    ks = jax.random.split(key, 8)

    # Node features data.x: [N, in_channels]
    x = jax.random.normal(ks[0], (N, in_channels), dtype=jnp.float32)

    # Deterministic edge_index: bidirectional ring graph, shape [2, 2N]
    src = np.concatenate([np.arange(N), (np.arange(N) + 1) % N])
    dst = np.concatenate([(np.arange(N) + 1) % N, np.arange(N)])
    edge_index = np.stack([src, dst]).astype(np.int32)

    # Dense adjacency with self-loops: adj[i, j] = 1 iff edge j -> i
    adj_np = np.zeros((N, N), dtype=np.float32)
    adj_np[edge_index[1], edge_index[0]] = 1.0
    np.fill_diagonal(adj_np, 1.0)          # PyG GATConv add_self_loops=True
    adj = jnp.asarray(adj_np)

    # Deterministic parameter init (PyG GATConv shapes)
    params = {
        "hidden": hidden_channels,
        "out_ch": out_channels,
        # conv1: in_channels -> hidden_channels, heads=4, concat
        "w1": 0.2 * jax.random.normal(ks[1], (in_channels, heads1 * hidden_channels),
                                      dtype=jnp.float32),
        "att_src1": 0.2 * jax.random.normal(ks[2], (heads1, hidden_channels),
                                            dtype=jnp.float32),
        "att_dst1": 0.2 * jax.random.normal(ks[3], (heads1, hidden_channels),
                                            dtype=jnp.float32),
        "bias1": 0.1 * jax.random.normal(ks[4], (1, heads1 * hidden_channels),
                                         dtype=jnp.float32),
        # conv2: 4*hidden_channels -> out_channels, heads=1
        "w2": 0.2 * jax.random.normal(ks[5], (heads1 * hidden_channels, out_channels),
                                      dtype=jnp.float32),
        "att_src2": 0.2 * jax.random.normal(ks[6], (1, out_channels), dtype=jnp.float32),
        "att_dst2": 0.2 * jax.random.normal(ks[7], (1, out_channels), dtype=jnp.float32),
        "bias2": jnp.zeros((1, out_channels), dtype=jnp.float32),
    }

    out = jax.block_until_ready(gat_embed_forward(x, adj, params))
    ref = jax.block_until_ready(gat_embed_ref(x, adj, params))

    assert out.shape == (N, out_channels), out.shape
    np.testing.assert_allclose(np.asarray(out), np.asarray(ref), rtol=2e-3, atol=2e-3)
    print("KERNEL_OK")
</pallas_src>

<mosaic_0001>
module attributes {stable_mosaic.version = 11 : i64} {
  func.func @gat_transform_kernel(%arg0: i32, %arg1: memref<128x16xf32, #tpu.memory_space<vmem>>, %arg2: memref<16x40xf32, #tpu.memory_space<vmem>>, %arg3: memref<128x40xf32, #tpu.memory_space<vmem>>) attributes {dimension_semantics = [#tpu.dimension_semantics<parallel>], iteration_bounds = array<i64: 1>, scalar_prefetch = 0 : i64, scratch_operands = 0 : i64, tpu.core_type = #tpu.core_type<tc>, window_params = [{transform_indices = @transform_0, window_bounds = array<i64: 128, 16>}, {pipeline_mode = #tpu.pipeline_mode<synchronous>, transform_indices = @transform_1, window_bounds = array<i64: 16, 40>}, {transform_indices = @transform_2, window_bounds = array<i64: 128, 40>}]} {
    %c0 = arith.constant 0 : index
    %c0_0 = arith.constant 0 : index
    %0 = vector.load %arg1[%c0, %c0_0] : memref<128x16xf32, #tpu.memory_space<vmem>>, vector<128x16xf32>
    %c0_1 = arith.constant 0 : index
    %c0_2 = arith.constant 0 : index
    %1 = vector.load %arg2[%c0_1, %c0_2] : memref<16x40xf32, #tpu.memory_space<vmem>>, vector<16x40xf32>
    %cst = arith.constant dense<0.000000e+00> : vector<128x40xf32>
    %2 = tpu.matmul %0, %1, %cst {dimension_numbers = #tpu.dot_dimension_numbers<[1], [0], [0], [1], [0, 0, 1, 1], [], []>} : vector<128x16xf32>, vector<16x40xf32>, vector<128x40xf32> -> vector<128x40xf32>
    %c0_3 = arith.constant 0 : index
    %c0_4 = arith.constant 0 : index
    %3 = vector.load %arg3[%c0_3, %c0_4] : memref<128x40xf32, #tpu.memory_space<vmem>>, vector<128x40xf32>
    tpu.vector_store %arg3[%c0_3, %c0_4], %2 {strides = array<i32>} : memref<128x40xf32, #tpu.memory_space<vmem>>, vector<128x40xf32>,
    return
  }
  func.func @transform_0(%arg0: i32) -> (i32, i32) {
    %c0_i32 = arith.constant 0 : i32
    %c0_i32_0 = arith.constant 0 : i32
    return %arg0, %c0_i32 : i32, i32
  }
  func.func @transform_1(%arg0: i32) -> (i32, i32) {
    %c0_i32 = arith.constant 0 : i32
    %c0_i32_0 = arith.constant 0 : i32
    %c0_i32_1 = arith.constant 0 : i32
    return %c0_i32, %c0_i32_0 : i32, i32
  }
  func.func @transform_2(%arg0: i32) -> (i32, i32) {
    %c0_i32 = arith.constant 0 : i32
    %c0_i32_0 = arith.constant 0 : i32
    return %arg0, %c0_i32 : i32, i32
  }
}

</mosaic_0001>

<llo_original>
// kernel: tpu_custom_call.1
$region0: #{tpu_custom_call.1}
  #allocation0 [shape = 'u32[]', space=smem, size = 0x4, offset = 0x4, fixed_abs, tag = 'smem constant byte address 0x4 - core index']
  #allocation1 [shape = 'u32[144,128]{1,0:T(1,128)}', space=vmem, size = 0x12000, scoped, tag = 'internal scratch']
  %s0 = inlined_call_operand.vmem [shape: f32[128,16], index: 0, kind: input, shape index: {}]
  %s1 = inlined_call_operand.vmem [shape: f32[16,40], index: 1, kind: input, shape index: {}]
  %s2 = inlined_call_operand.vmem [shape: f32[128,40], index: 2, kind: output, shape index: {}]
  %s3 = sld [smem:[#allocation0]]
  $region18: #{tpu_custom_call.1} parent=0
    _
  %s5 = ssub.s32 1, %s3
  %s6 = scalar_select 0, %s5, %s3
  // Predicated region
  $region2: #{tpu_custom_call.1} parent=0 // pred_check
    _
  $region3: #{tpu_custom_call.1} parent=0 // pred_check_branch
    %8 = sbr.rel (0) target = $region5
  $region4: #{tpu_custom_call.1} parent=0 // pred_region
    _
  $region5: #{tpu_custom_call.1} parent=0 // pred_fallthru
    _
  // Predicated region
  $region6: #{tpu_custom_call.1} parent=0 // pred_check
    _
  $region7: #{tpu_custom_call.1} parent=0 // pred_check_branch
    %10 = sbr.rel (0) target = $region9
  $region8: #{tpu_custom_call.1} parent=0 // pred_region
    _
  $region9: #{tpu_custom_call.1} parent=0 // pred_fallthru
    _
  %v11 = vld [vmem:[%s0] sm:$0xff]
  %v12 = vld [vmem:[%s0 + $0x8] sm:$0xff]
  %v13 = vld [vmem:[%s0 + $0x10] sm:$0xff]
  %v14 = vld [vmem:[%s0 + $0x18] sm:$0xff]
  %v15 = vld [vmem:[%s0 + $0x20] sm:$0xff]
  %v16 = vld [vmem:[%s0 + $0x28] sm:$0xff]
  %v17 = vld [vmem:[%s0 + $0x30] sm:$0xff]
  %v18 = vld [vmem:[%s0 + $0x38] sm:$0xff]
  %v19 = vld [vmem:[%s0 + $0x40] sm:$0xff]
  %v20 = vld [vmem:[%s0 + $0x48] sm:$0xff]
  %v21 = vld [vmem:[%s0 + $0x50] sm:$0xff]
  %v22 = vld [vmem:[%s0 + $0x58] sm:$0xff]
  %v23 = vld [vmem:[%s0 + $0x60] sm:$0xff]
  %v24 = vld [vmem:[%s0 + $0x68] sm:$0xff]
  %v25 = vld [vmem:[%s0 + $0x70] sm:$0xff]
  %v26 = vld [vmem:[%s0 + $0x78] sm:$0xff]
  %v27 = vld [vmem:[%s1] sm:$0xff]
  %v28 = vld [vmem:[%s1 + $0x8] sm:$0xff]
  %vm29 = vcmask 130048
  %v31 = vsel %vm29, %v11, 0
  %v34 = vsel %vm29, %v12, 0
  %v37 = vsel %vm29, %v13, 0
  %v40 = vsel %vm29, %v14, 0
  %v43 = vsel %vm29, %v15, 0
  %v46 = vsel %vm29, %v16, 0
  %v49 = vsel %vm29, %v17, 0
  %v52 = vsel %vm29, %v18, 0
  %v55 = vsel %vm29, %v19, 0
  %v58 = vsel %vm29, %v20, 0
  %v61 = vsel %vm29, %v21, 0
  %v64 = vsel %vm29, %v22, 0
  %v67 = vsel %vm29, %v23, 0
  %v70 = vsel %vm29, %v24, 0
  %v73 = vsel %vm29, %v25, 0
  %v76 = vsel %vm29, %v26, 0
  %78 = vmatprep.subr.mxu0 0.0
  %79 = vmatpush1.msra.mxu0 0.0
  %80 = vmatprep.subr.mxu0 0.0
  %81 = vmatpush1.msra.mxu0 0.0
  %82 = vmatprep.subr.mxu0 0.0
  %83 = vmatpush1.msra.mxu0 0.0
  %84 = vmatprep.subr.mxu0 0.0
  %85 = vmatpush1.msra.mxu0 0.0
  %86 = vmatprep.subr.mxu0 0.0
  %87 = vmatpush1.msra.mxu0 0.0
  %88 = vmatprep.subr.mxu0 0.0
  %89 = vmatpush1.msra.mxu0 0.0
  %90 = vmatprep.subr.mxu0 0.0
  %91 = vmatpush1.msra.mxu0 0.0
  %92 = vmatprep.subr.mxu0 0.0
  %93 = vmatpush1.msra.mxu0 0.0
  %94 = vmatprep.subr.mxu0 0.0
  %95 = vmatpush1.msra.mxu0 0.0
  %96 = vmatprep.subr.mxu0 0.0
  %97 = vmatpush1.msra.mxu0 0.0
  %98 = vmatprep.subr.mxu0 0.0
  %99 = vmatpush1.msra.mxu0 0.0
  %100 = vmatprep.subr.mxu0 0.0
  %101 = vmatpush1.msra.mxu0 0.0
  %102 = vmatprep.subr.mxu0 0.0
  %103 = vmatpush1.msra.mxu0 0.0
  %104 = vmatprep.subr.mxu0 0.0
  %105 = vmatpush1.msra.mxu0 0.0
  %106 = vmatprep.subr.mxu0 0.0
  %107 = vmatpush1.msra.mxu0 %v28
  %108 = vmatprep.subr.mxu0 0.0
  %109 = vmatpush1.msra.mxu0 %v27
  %110 = vmatprep.subr.mxu0 0.0
  %111 = vmatpush2.msra.mxu0 0.0
  %112 = vmatprep.subr.mxu0 0.0
  %113 = vmatpush2.msra.mxu0 0.0
  %114 = vmatprep.subr.mxu0 0.0
  %115 = vmatpush2.msra.mxu0 0.0
  %116 = vmatprep.subr.mxu0 0.0
  %117 = vmatpush2.msra.mxu0 0.0
  %118 = vmatprep.subr.mxu0 0.0
  %119 = vmatpush2.msra.mxu0 0.0
  %120 = vmatprep.subr.mxu0 0.0
  %121 = vmatpush2.msra.mxu0 0.0
  %122 = vmatprep.subr.mxu0 0.0
  %123 = vmatpush2.msra.mxu0 0.0
  %124 = vmatprep.subr.mxu0 0.0
  %125 = vmatpush2.msra.mxu0 0.0
  %126 = vmatprep.subr.mxu0 0.0
  %127 = vmatpush2.msra.mxu0 0.0
  %128 = vmatprep.subr.mxu0 0.0
  %129 = vmatpush2.msra.mxu0 0.0
  %130 = vmatprep.subr.mxu0 0.0
  %131 = vmatpush2.msra.mxu0 0.0
  %132 = vmatprep.subr.mxu0 0.0
  %133 = vmatpush2.msra.mxu0 0.0
  %134 = vmatprep.subr.mxu0 0.0
  %135 = vmatpush2.msra.mxu0 0.0
  %136 = vmatprep.subr.mxu0 0.0
  %137 = vmatpush2.msra.mxu0 0.0
  %138 = vmatprep.subr.mxu0 0.0
  %139 = vmatpush2.msra.mxu0 0.0
  %140 = vmatprep.subr.mxu0 0.0
  %141 = vmatpush2.msra.mxu0 0.0
  %142 = vmatprep.mubr.f32.mxu0 0.0
  %143 = vmatmul.mubr.f32.gmra.mxu0 %v31
  %v144 = vpop.f32.mrf.mxu0
  %v145 = vadd.f32 0.0, %v144
  %v146 = vpop.f32.mrf.mxu0
  %147 = vmatprep.mubr.f32.mxu0 0.0
  %148 = vmatmul.mubr.f32.gmra.mxu0 %v34
  %v149 = vpop.f32.mrf.mxu0
  %v150 = vadd.f32 0.0, %v149
  %v151 = vpop.f32.mrf.mxu0
  %152 = vmatprep.mubr.f32.mxu0 0.0
  %153 = vmatmul.mubr.f32.gmra.mxu0 %v37
  %v154 = vpop.f32.mrf.mxu0
  %v155 = vadd.f32 0.0, %v154
  %v156 = vpop.f32.mrf.mxu0
  %157 = vmatprep.mubr.f32.mxu0 0.0
  %158 = vmatmul.mubr.f32.gmra.mxu0 %v40
  %v159 = vpop.f32.mrf.mxu0
  %v160 = vadd.f32 0.0, %v159
  %v161 = vpop.f32.mrf.mxu0
  %162 = vmatprep.mubr.f32.mxu0 0.0
  %163 = vmatmul.mubr.f32.gmra.mxu0 %v43
  %v164 = vpop.f32.mrf.mxu0
  %v165 = vadd.f32 0.0, %v164
  %v166 = vpop.f32.mrf.mxu0
  %167 = vmatprep.mubr.f32.mxu0 0.0
  %168 = vmatmul.mubr.f32.gmra.mxu0 %v46
  %v169 = vpop.f32.mrf.mxu0
  %v170 = vadd.f32 0.0, %v169
  %v171 = vpop.f32.mrf.mxu0
  %172 = vmatprep.mubr.f32.mxu0 0.0
  %173 = vmatmul.mubr.f32.gmra.mxu0 %v49
  %v174 = vpop.f32.mrf.mxu0
  %v175 = vadd.f32 0.0, %v174
  %v176 = vpop.f32.mrf.mxu0
  %177 = vmatprep.mubr.f32.mxu0 0.0
  %178 = vmatmul.mubr.f32.gmra.mxu0 %v52
  %v179 = vpop.f32.mrf.mxu0
  %v180 = vadd.f32 0.0, %v179
  %v181 = vpop.f32.mrf.mxu0
  %182 = vmatprep.mubr.f32.mxu0 0.0
  %183 = vmatmul.mubr.f32.gmra.mxu0 %v55
  %v184 = vpop.f32.mrf.mxu0
  %v185 = vadd.f32 0.0, %v184
  %v186 = vpop.f32.mrf.mxu0
  %187 = vmatprep.mubr.f32.mxu0 0.0
  %188 = vmatmul.mubr.f32.gmra.mxu0 %v58
  %v189 = vpop.f32.mrf.mxu0
  %v190 = vadd.f32 0.0, %v189
  %v191 = vpop.f32.mrf.mxu0
  %192 = vmatprep.mubr.f32.mxu0 0.0
  %193 = vmatmul.mubr.f32.gmra.mxu0 %v61
  %v194 = vpop.f32.mrf.mxu0
  %v195 = vadd.f32 0.0, %v194
  %v196 = vpop.f32.mrf.mxu0
  %197 = vmatprep.mubr.f32.mxu0 0.0
  %198 = vmatmul.mubr.f32.gmra.mxu0 %v64
  %v199 = vpop.f32.mrf.mxu0
  %v200 = vadd.f32 0.0, %v199
  %v201 = vpop.f32.mrf.mxu0
  %202 = vmatprep.mubr.f32.mxu0 0.0
  %203 = vmatmul.mubr.f32.gmra.mxu0 %v67
  %v204 = vpop.f32.mrf.mxu0
  %v205 = vadd.f32 0.0, %v204
  %v206 = vpop.f32.mrf.mxu0
  %207 = vmatprep.mubr.f32.mxu0 0.0
  %208 = vmatmul.mubr.f32.gmra.mxu0 %v70
  %v209 = vpop.f32.mrf.mxu0
  %v210 = vadd.f32 0.0, %v209
  %v211 = vpop.f32.mrf.mxu0
  %212 = vmatprep.mubr.f32.mxu0 0.0
  %213 = vmatmul.mubr.f32.gmra.mxu0 %v73
  %v214 = vpop.f32.mrf.mxu0
  %v215 = vadd.f32 0.0, %v214
  %v216 = vpop.f32.mrf.mxu0
  %217 = vmatprep.mubr.f32.mxu0 0.0
  %218 = vmatmul.mubr.f32.gmra.mxu0 %v76
  %v219 = vpop.f32.mrf.mxu0
  %v220 = vadd.f32 0.0, %v219
  %v221 = vpop.f32.mrf.mxu0
  %222 = vdwg.mxu0
  %vm223 = vcmask 326656
  %224 = vst.msk [vmem:[%s2] sm:$0xff] %vm223, %v145
  %225 = vst.msk [vmem:[%s2 + $0x8] sm:$0xff] %vm223, %v150
  %226 = vst.msk [vmem:[%s2 + $0x10] sm:$0xff] %vm223, %v155
  %227 = vst.msk [vmem:[%s2 + $0x18] sm:$0xff] %vm223, %v160
  %228 = vst.msk [vmem:[%s2 + $0x20] sm:$0xff] %vm223, %v165
  %229 = vst.msk [vmem:[%s2 + $0x28] sm:$0xff] %vm223, %v170
  %230 = vst.msk [vmem:[%s2 + $0x30] sm:$0xff] %vm223, %v175
  %231 = vst.msk [vmem:[%s2 + $0x38] sm:$0xff] %vm223, %v180
  %232 = vst.msk [vmem:[%s2 + $0x40] sm:$0xff] %vm223, %v185
  %233 = vst.msk [vmem:[%s2 + $0x48] sm:$0xff] %vm223, %v190
  %234 = vst.msk [vmem:[%s2 + $0x50] sm:$0xff] %vm223, %v195
  %235 = vst.msk [vmem:[%s2 + $0x58] sm:$0xff] %vm223, %v200
  %236 = vst.msk [vmem:[%s2 + $0x60] sm:$0xff] %vm223, %v205
  %237 = vst.msk [vmem:[%s2 + $0x68] sm:$0xff] %vm223, %v210
  %238 = vst.msk [vmem:[%s2 + $0x70] sm:$0xff] %vm223, %v215
  %239 = vst.msk [vmem:[%s2 + $0x78] sm:$0xff] %vm223, %v220
  // Predicated region
  $region10: #{tpu_custom_call.1} parent=0 // pred_check
    _
  $region11: #{tpu_custom_call.1} parent=0 // pred_check_branch
    %241 = sbr.rel (0) target = $region13
  $region12: #{tpu_custom_call.1} parent=0 // pred_region
    _
  $region13: #{tpu_custom_call.1} parent=0 // pred_fallthru
    _
  // Predicated region
  $region14: #{tpu_custom_call.1} parent=0 // pred_check
    _
  $region15: #{tpu_custom_call.1} parent=0 // pred_check_branch
    %243 = sbr.rel (0) target = $region17
  $region16: #{tpu_custom_call.1} parent=0 // pred_region
    _
  $region17: #{tpu_custom_call.1} parent=0 // pred_fallthru
    _

</llo_original>
